<compile_context>
chip_gen: v7x
topology: tpu7x:2x2x1
jax: 0.10.0
libtpu: 0.0.40
codegen_flags: <defaults>
</compile_context>

<pallas_src>
import functools

import jax
import jax.numpy as jnp
from jax.experimental import pallas as pl
from jax.experimental.pallas import tpu as pltpu


def _round_up(a, b):
    return (a + b - 1) // b * b


def _conv_stage_kernel(w_ref, x_ref, o_ref):
    """One (n, d, row-tile) grid step: conv-as-matmul + fused bias + LeakyReLU(0.1).

    w_ref: (Cout, KPAD)  weights flattened over (tap, cin); bias in column 27*Cin
    x_ref: (KPAD, TR)    im2col rows for TR output voxels (lane-dense along TR)
    o_ref: (Cout, TR)    output voxels for this tile (unpadded channel count)
    """
    acc = jnp.dot(w_ref[...], x_ref[...], preferred_element_type=jnp.float32)
    # LeakyReLU(0.1): mul+max (one fewer VALU op than cmp+select).
    o_ref[...] = jnp.maximum(acc, 0.1 * acc).astype(o_ref.dtype)


def conv_stage_ndchw(x_ndchw, w_oidhw, bias, *, compute_dtype=jnp.bfloat16):
    """One ConvBlockOneStage (normalization='none').

    x_ndchw: (N, D, Cin, H, W) activation in the internal NDCHW layout.
    w_oidhw: (Cout, Cin, 3, 3, 3) PyTorch Conv3d weight.
    bias:    (Cout,)
    Returns  (N, D, Cout, H, W) in compute_dtype.
    """
    N, D, Cin, H, W = x_ndchw.shape
    Cout = w_oidhw.shape[0]

    K = 27 * Cin + 1                      # +1 lane carries the bias
    KPAD = _round_up(K, 128)              # lane/MXU-friendly contraction width
    rows = H * W                          # output voxels per depth plane
    TR = _round_up(rows, 8) if _round_up(rows, 8) <= 512 else 256
    HWPAD = _round_up(rows, TR)

    x = x_ndchw.astype(compute_dtype)
    # Zero halo == Conv3d(padding=1); pad D, H, W only.
    xp = jnp.pad(x, ((0, 0), (1, 1), (0, 0), (1, 1), (1, 1)))

    # --- im2col (wrapper-side layout plumbing) -------------------------------
    # k = tap*Cin + cin with tap = kd*9 + kh*3 + kw  (matches weight flattening)
    taps = [xp[:, kd:kd + D, :, kh:kh + H, kw:kw + W]
            for kd in range(3) for kh in range(3) for kw in range(3)]
    xcol = jnp.stack(taps, axis=2)                       # (N, D, 27, Cin, H, W)
    xcol = xcol.reshape(N, D, 27 * Cin, rows)            # (N, D, 27*Cin, H*W)
    ones = jnp.ones((N, D, 1, rows), compute_dtype)      # bias lane
    xcol = jnp.concatenate([xcol, ones], axis=2)         # (N, D, K, H*W)
    xcol = jnp.pad(xcol, ((0, 0), (0, 0), (0, KPAD - K), (0, HWPAD - rows)))

    # (Cout, Cin, 3,3,3) -> (Cout, 27*Cin) with k = tap*Cin + cin; bias appended.
    w_mat = jnp.transpose(w_oidhw, (0, 2, 3, 4, 1)).reshape(Cout, 27 * Cin)
    w_mat = jnp.concatenate([w_mat, bias.reshape(Cout, 1)], axis=1)
    w_mat = jnp.pad(w_mat, ((0, 0), (0, KPAD - K))).astype(compute_dtype)

    out = pl.pallas_call(
        _conv_stage_kernel,
        out_shape=jax.ShapeDtypeStruct((N, D, Cout, HWPAD), compute_dtype),
        grid=(N, D, HWPAD // TR),
        in_specs=[
            # Constant across the grid and only Cout x KPAD elements -> the
            # default double buffer costs ~KBs, so no single-buffering needed.
            pl.BlockSpec((Cout, KPAD), lambda n, d, r: (0, 0)),
            pl.BlockSpec((None, None, KPAD, TR), lambda n, d, r: (n, d, 0, r)),
        ],
        out_specs=pl.BlockSpec((None, None, Cout, TR),
                               lambda n, d, r: (n, d, 0, r)),
        compiler_params=pltpu.CompilerParams(
            dimension_semantics=("parallel", "parallel", "parallel")),
    )(w_mat, xcol)

    # Drop spatial padding; stay in the internal NDCHW layout for the next stage.
    return out[:, :, :, :rows].reshape(N, D, Cout, H, W)


def init_conv_block_params(key, n_stages, n_filters_in, n_filters_out):
    """Deterministic parameter init (PyTorch-like uniform bounds), OIDHW layout."""
    params = []
    cin = n_filters_in
    for _ in range(n_stages):
        key, kw, kb = jax.random.split(key, 3)
        fan_in = cin * 27
        bound = 1.0 / jnp.sqrt(jnp.float32(fan_in))
        w = jax.random.uniform(kw, (n_filters_out, cin, 3, 3, 3),
                               jnp.float32, -bound, bound)
        b = jax.random.uniform(kb, (n_filters_out,), jnp.float32, -bound, bound)
        params.append((w, b))
        cin = n_filters_out
    return params


@functools.partial(jax.jit, static_argnames=("compute_dtype",))
def conv_block_forward(x_ncdhw, params, compute_dtype=jnp.bfloat16):
    """ConvBlock.forward: PyTorch NCDHW in / NCDHW out."""
    x = jnp.transpose(x_ncdhw, (0, 2, 1, 3, 4))        # NCDHW -> NDCHW (internal)
    for w_oidhw, b in params:
        x = conv_stage_ndchw(x, w_oidhw, b, compute_dtype=compute_dtype)
    x = jnp.transpose(x, (0, 2, 1, 3, 4))              # NDCHW -> NCDHW
    return x.astype(x_ncdhw.dtype)


def conv_block_reference(x_ncdhw, params):
    """Pure-JAX reference of the PyTorch forward (correctness check)."""
    x = x_ncdhw
    for w_oidhw, b in params:
        x = jax.lax.conv_general_dilated(
            x, w_oidhw, window_strides=(1, 1, 1),
            padding=((1, 1), (1, 1), (1, 1)),
            dimension_numbers=('NCDHW', 'OIDHW', 'NCDHW'))
        x = x + b.reshape(1, -1, 1, 1, 1)
        x = jnp.where(x >= 0, x, 0.1 * x)
    return x


if __name__ == "__main__":
    key = jax.random.PRNGKey(0)
    k_x, k_p = jax.random.split(key)

    # Small, module-consistent shapes: ConvBlock(n_stages=2, 4 -> 8) on an 8^3 volume.
    N, CIN, COUT, D, H, W = 2, 4, 8, 8, 8, 8
    N_STAGES = 2

    x = jax.random.normal(k_x, (N, CIN, D, H, W), jnp.float32)   # NCDHW
    params = init_conv_block_params(k_p, N_STAGES, CIN, COUT)

    ref = conv_block_reference(x, params)

    # f32 compute path: exact parity with the PyTorch module semantics.
    out_f32 = jax.block_until_ready(
        conv_block_forward(x, params, compute_dtype=jnp.float32))
    assert out_f32.shape == (N, COUT, D, H, W), out_f32.shape
    assert jnp.allclose(out_f32, ref, rtol=2e-3, atol=2e-3), (
        float(jnp.max(jnp.abs(out_f32 - ref))))

    # Default path: bf16 activations/weights, f32 MXU accumulation (half the
    # HBM/VMEM traffic, native bf16 MXU rate on v5e/v6e/v7x).  bf16 rounding
    # compounds across stages -> looser tolerance vs. the f32 reference.
    out_bf16 = jax.block_until_ready(conv_block_forward(x, params))
    assert out_bf16.shape == (N, COUT, D, H, W), out_bf16.shape
    assert jnp.allclose(out_bf16, ref, rtol=6e-2, atol=6e-2), (
        float(jnp.max(jnp.abs(out_bf16 - ref))))

    print("KERNEL_OK")
</pallas_src>

<mosaic_0001>
module attributes {stable_mosaic.version = 11 : i64} {
  func.func @_conv_stage_kernel(%arg0: i32, %arg1: i32, %arg2: i32, %arg3: memref<8x128xf32, #tpu.memory_space<vmem>>, %arg4: memref<1x1x128x64xf32, #tpu.memory_space<vmem>>, %arg5: memref<1x1x8x64xf32, #tpu.memory_space<vmem>>) attributes {dimension_semantics = [#tpu.dimension_semantics<parallel>, #tpu.dimension_semantics<parallel>, #tpu.dimension_semantics<parallel>], iteration_bounds = array<i64: 2, 8, 1>, scalar_prefetch = 0 : i64, scratch_operands = 0 : i64, tpu.core_type = #tpu.core_type<tc>, window_params = [{pipeline_mode = #tpu.pipeline_mode<synchronous>, transform_indices = @transform_0, window_bounds = array<i64: 8, 128>}, {transform_indices = @transform_1, window_bounds = array<i64: 1, 1, 128, 64>}, {transform_indices = @transform_2, window_bounds = array<i64: 1, 1, 8, 64>}]} {
    %c0 = arith.constant 0 : index
    %c0_0 = arith.constant 0 : index
    %0 = vector.load %arg3[%c0, %c0_0] : memref<8x128xf32, #tpu.memory_space<vmem>>, vector<8x128xf32>
    %c0_1 = arith.constant 0 : index
    %c0_2 = arith.constant 0 : index
    %c0_3 = arith.constant 0 : index
    %c0_4 = arith.constant 0 : index
    %1 = vector.load %arg4[%c0_1, %c0_2, %c0_3, %c0_4] : memref<1x1x128x64xf32, #tpu.memory_space<vmem>>, vector<1x1x128x64xf32>
    %2 = vector.shape_cast %1 : vector<1x1x128x64xf32> to vector<128x64xf32>
    %cst = arith.constant dense<0.000000e+00> : vector<8x64xf32>
    %3 = tpu.matmul %0, %2, %cst {dimension_numbers = #tpu.dot_dimension_numbers<[1], [0], [0], [1], [0, 0, 1, 1], [], []>} : vector<8x128xf32>, vector<128x64xf32>, vector<8x64xf32> -> vector<8x64xf32>
    %cst_5 = arith.constant 1.000000e-01 : f32
    %4 = vector.broadcast %cst_5 : f32 to vector<8x64xf32>
    %5 = arith.mulf %4, %3 : vector<8x64xf32>
    %6 = arith.maximumf %3, %5 : vector<8x64xf32>
    %c0_6 = arith.constant 0 : index
    %c0_7 = arith.constant 0 : index
    %c0_8 = arith.constant 0 : index
    %c0_9 = arith.constant 0 : index
    %7 = vector.load %arg5[%c0_6, %c0_7, %c0_8, %c0_9] : memref<1x1x8x64xf32, #tpu.memory_space<vmem>>, vector<1x1x8x64xf32>
    %8 = vector.shape_cast %7 : vector<1x1x8x64xf32> to vector<8x64xf32>
    %9 = vector.shape_cast %6 : vector<8x64xf32> to vector<1x1x8x64xf32>
    tpu.vector_store %arg5[%c0_6, %c0_7, %c0_8, %c0_9], %9 {strides = array<i32>} : memref<1x1x8x64xf32, #tpu.memory_space<vmem>>, vector<1x1x8x64xf32>,
    return
  }
  func.func @transform_0(%arg0: i32, %arg1: i32, %arg2: i32) -> (i32, i32) {
    %c0_i32 = arith.constant 0 : i32
    %c0_i32_0 = arith.constant 0 : i32
    %c0_i32_1 = arith.constant 0 : i32
    return %c0_i32, %c0_i32_0 : i32, i32
  }
  func.func @transform_1(%arg0: i32, %arg1: i32, %arg2: i32) -> (i32, i32, i32, i32) {
    %c0_i32 = arith.constant 0 : i32
    %c0_i32_0 = arith.constant 0 : i32
    return %arg0, %arg1, %c0_i32, %arg2 : i32, i32, i32, i32
  }
  func.func @transform_2(%arg0: i32, %arg1: i32, %arg2: i32) -> (i32, i32, i32, i32) {
    %c0_i32 = arith.constant 0 : i32
    %c0_i32_0 = arith.constant 0 : i32
    return %arg0, %arg1, %c0_i32, %arg2 : i32, i32, i32, i32
  }
}

module attributes {stable_mosaic.version = 11 : i64} {
  func.func @_conv_stage_kernel(%arg0: i32, %arg1: i32, %arg2: i32, %arg3: memref<8x256xf32, #tpu.memory_space<vmem>>, %arg4: memref<1x1x256x64xf32, #tpu.memory_space<vmem>>, %arg5: memref<1x1x8x64xf32, #tpu.memory_space<vmem>>) attributes {dimension_semantics = [#tpu.dimension_semantics<parallel>, #tpu.dimension_semantics<parallel>, #tpu.dimension_semantics<parallel>], iteration_bounds = array<i64: 2, 8, 1>, scalar_prefetch = 0 : i64, scratch_operands = 0 : i64, tpu.core_type = #tpu.core_type<tc>, window_params = [{pipeline_mode = #tpu.pipeline_mode<synchronous>, transform_indices = @transform_0, window_bounds = array<i64: 8, 256>}, {transform_indices = @transform_1, window_bounds = array<i64: 1, 1, 256, 64>}, {transform_indices = @transform_2, window_bounds = array<i64: 1, 1, 8, 64>}]} {
    %c0 = arith.constant 0 : index
    %c0_0 = arith.constant 0 : index
    %0 = vector.load %arg3[%c0, %c0_0] : memref<8x256xf32, #tpu.memory_space<vmem>>, vector<8x256xf32>
    %c0_1 = arith.constant 0 : index
    %c0_2 = arith.constant 0 : index
    %c0_3 = arith.constant 0 : index
    %c0_4 = arith.constant 0 : index
    %1 = vector.load %arg4[%c0_1, %c0_2, %c0_3, %c0_4] : memref<1x1x256x64xf32, #tpu.memory_space<vmem>>, vector<1x1x256x64xf32>
    %2 = vector.shape_cast %1 : vector<1x1x256x64xf32> to vector<256x64xf32>
    %cst = arith.constant dense<0.000000e+00> : vector<8x64xf32>
    %3 = tpu.matmul %0, %2, %cst {dimension_numbers = #tpu.dot_dimension_numbers<[1], [0], [0], [1], [0, 0, 1, 1], [], []>} : vector<8x256xf32>, vector<256x64xf32>, vector<8x64xf32> -> vector<8x64xf32>
    %cst_5 = arith.constant 1.000000e-01 : f32
    %4 = vector.broadcast %cst_5 : f32 to vector<8x64xf32>
    %5 = arith.mulf %4, %3 : vector<8x64xf32>
    %6 = arith.maximumf %3, %5 : vector<8x64xf32>
    %c0_6 = arith.constant 0 : index
    %c0_7 = arith.constant 0 : index
    %c0_8 = arith.constant 0 : index
    %c0_9 = arith.constant 0 : index
    %7 = vector.load %arg5[%c0_6, %c0_7, %c0_8, %c0_9] : memref<1x1x8x64xf32, #tpu.memory_space<vmem>>, vector<1x1x8x64xf32>
    %8 = vector.shape_cast %7 : vector<1x1x8x64xf32> to vector<8x64xf32>
    %9 = vector.shape_cast %6 : vector<8x64xf32> to vector<1x1x8x64xf32>
    tpu.vector_store %arg5[%c0_6, %c0_7, %c0_8, %c0_9], %9 {strides = array<i32>} : memref<1x1x8x64xf32, #tpu.memory_space<vmem>>, vector<1x1x8x64xf32>,
    return
  }
  func.func @transform_0(%arg0: i32, %arg1: i32, %arg2: i32) -> (i32, i32) {
    %c0_i32 = arith.constant 0 : i32
    %c0_i32_0 = arith.constant 0 : i32
    %c0_i32_1 = arith.constant 0 : i32
    return %c0_i32, %c0_i32_0 : i32, i32
  }
  func.func @transform_1(%arg0: i32, %arg1: i32, %arg2: i32) -> (i32, i32, i32, i32) {
    %c0_i32 = arith.constant 0 : i32
    %c0_i32_0 = arith.constant 0 : i32
    return %arg0, %arg1, %c0_i32, %arg2 : i32, i32, i32, i32
  }
  func.func @transform_2(%arg0: i32, %arg1: i32, %arg2: i32) -> (i32, i32, i32, i32) {
    %c0_i32 = arith.constant 0 : i32
    %c0_i32_0 = arith.constant 0 : i32
    return %arg0, %arg1, %c0_i32, %arg2 : i32, i32, i32, i32
  }
}

</mosaic_0001>

<llo_original>
// kernel: conv_block_forward.2
$region0: #{conv_block_forward.2}
  #allocation0 [shape = 'u32[]', space=smem, size = 0x4, offset = 0x4, fixed_abs, tag = 'smem constant byte address 0x4 - core index']
  #allocation1 [shape = 'u32[144,128]{1,0:T(1,128)}', space=vmem, size = 0x12000, scoped, tag = 'internal scratch']
  %s0 = inlined_call_operand.vmem [shape: f32[8,128], index: 0, kind: input, shape index: {}]
  %s1 = inlined_call_operand.vmem [shape: f32[2,8,128,64], index: 1, kind: input, shape index: {}]
  %s2 = inlined_call_operand.vmem [shape: f32[2,8,8,64], index: 2, kind: output, shape index: {}]
  %s3 = sld [smem:[#allocation0]]
  $region41: #{conv_block_forward.2} parent=0
    _
  %s5 = ssub.s32 1, %s3
  %s6 = scalar_select 0, %s5, %s3
  loop: start=0, step=1, limit=18
  $region2: #{conv_block_forward.2} parent=0 // loop_pre_header
    _
  $region3: #{conv_block_forward.2} parent=0 // loop_header
    %s8 = sphi 0, %s12
    %p9 = scmp.ge.s32.totalorder %s8, 18
    %s15 = sphi 0, %s34
    %s16 = sphi 0, %s30
    %s17 = sphi 0, %s26
    %s18 = sphi 0, %s15
    %s19 = sphi 0, %s16
    %s20 = sphi 0, %s17
    %s21 = sphi 0, %s18
    %s22 = sphi 0, %s19
    %s23 = sphi 0, %s20
    %s35 = sphi 0, %s35
    %s37 = sphi 0, %s35
    %s38 = sphi 0, %s37
    %s52 = sphi 0, %s38
    %s62 = sphi 0, %s64
    %s65 = sphi 0, %s62
    %s66 = sphi 0, %s65
    %s82 = sphi 0, %s66
    %s92 = sphi 0, %s94
    %s95 = sphi 0, %s92
    %s96 = sphi 0, %s95
    %s112 = sphi 0, %s96
  $region4: #{conv_block_forward.2} parent=0 // loop_header_branch
    %11 = sbr.rel (%p9) target = $region8
  $region5: #{conv_block_forward.2} parent=0 // loop_body
    %s13 = ssub.s32 %s8, 1
    %s14 = ssub.s32 %s8, 2
    %s24 = sadd.s32 1, %s17
    %p25 = scmp.ge.s32.totalorder %s24, 1
    %s26 = scalar_select %p25, 0, %s24
    %s27 = sadd.s32 1, %s16
    %s28 = scalar_select %p25, %s27, %s16
    %p29 = scmp.ge.s32.totalorder %s28, 8
    %s30 = scalar_select %p29, 0, %s28
    %s31 = sadd.s32 1, %s15
    %s32 = scalar_select %p29, %s31, %s15
    %p33 = scmp.ge.s32.totalorder %s32, 2
    %s34 = scalar_select %p33, 0, %s32
    %s36 = sadd.s32 %s35, 1
    %p39 = scmp.eq.s32.totalorder %s8, 15
    %p40 = scmp.ne.s32.totalorder %s35, %s37
    %p41 = scmp.eq.s32.totalorder %s8, 0
    %p42 = por %p40, %p41
    %p43 = scmp.ne.s32.totalorder %s35, %s37
    %p44 = scmp.eq.s32.totalorder %s13, 15
    %p45 = por %p43, %p44
    %p46 = scmp.ne.s32.totalorder %s37, %s38
    %p47 = scmp.eq.s32.totalorder %s13, 0
    %p48 = por %p46, %p47
    %p49 = scmp.ne.s32.totalorder %s37, %s38
    %p50 = scmp.eq.s32.totalorder %s14, 15
    %p51 = por %p49, %p50
    %p53 = scmp.ne.s32.totalorder %s38, %s52
    %p54 = scmp.eq.s32.totalorder %s14, 0
    %p55 = por %p53, %p54
    %s56 = ssub.s32 %s15, %s34
    %s57 = ssub.s32 %s16, %s30
    %s58 = sor.u32 %s56, %s57
    %s59 = ssub.s32 %s17, %s26
    %s60 = sor.u32 %s58, %s59
    %p61 = scmp.eq.s32.totalorder %s60, 0
    %s63 = sadd.s32 %s62, 1
    %s64 = scalar_select %p61, %s62, %s63
    %p67 = pneg %p61
    %p68 = scmp.eq.s32.totalorder %s8, 15
    %p69 = por %p67, %p68
    %p70 = scmp.ne.s32.totalorder %s62, %s65
    %p71 = scmp.eq.s32.totalorder %s8, 0
    %p72 = por %p70, %p71
    %p73 = scmp.ne.s32.totalorder %s62, %s65
    %p74 = scmp.eq.s32.totalorder %s13, 15
    %p75 = por %p73, %p74
    %p76 = scmp.ne.s32.totalorder %s65, %s66
    %p77 = scmp.eq.s32.totalorder %s13, 0
    %p78 = por %p76, %p77
    %p79 = scmp.ne.s32.totalorder %s65, %s66
    %p80 = scmp.eq.s32.totalorder %s14, 15
    %p81 = por %p79, %p80
    %p83 = scmp.ne.s32.totalorder %s66, %s82
    %p84 = scmp.eq.s32.totalorder %s14, 0
    %p85 = por %p83, %p84
    %s86 = ssub.s32 %s15, %s34
    %s87 = ssub.s32 %s16, %s30
    %s88 = sor.u32 %s86, %s87
    %s89 = ssub.s32 %s17, %s26
    %s90 = sor.u32 %s88, %s89
    %p91 = scmp.eq.s32.totalorder %s90, 0
    %s93 = sadd.s32 %s92, 1
    %s94 = scalar_select %p91, %s92, %s93
    %p97 = pneg %p91
    %p98 = scmp.eq.s32.totalorder %s8, 15
    %p99 = por %p97, %p98
    %p100 = scmp.ne.s32.totalorder %s92, %s95
    %p101 = scmp.eq.s32.totalorder %s8, 0
    %p102 = por %p100, %p101
    %p103 = scmp.ne.s32.totalorder %s92, %s95
    %p104 = scmp.eq.s32.totalorder %s13, 15
    %p105 = por %p103, %p104
    %p106 = scmp.ne.s32.totalorder %s95, %s96
    %p107 = scmp.eq.s32.totalorder %s13, 0
    %p108 = por %p106, %p107
    %p109 = scmp.ne.s32.totalorder %s95, %s96
    %p110 = scmp.eq.s32.totalorder %s14, 15
    %p111 = por %p109, %p110
    %p113 = scmp.ne.s32.totalorder %s96, %s112
    %p114 = scmp.eq.s32.totalorder %s14, 0
    %p115 = por %p113, %p114
    %p116 = scmp.le.s32.totalorder 1, %s8
    %p117 = scmp.lt.s32.totalorder %s8, 17
    %p118 = pnand %p116, %p117
    %p119 = pneg %p118
    // Predicated region
    $region9: #{conv_block_forward.2} parent=5 // pred_check
      _
    $region10: #{conv_block_forward.2} parent=5 // pred_check_branch
      %121 = sbr.rel (%p118) target = $region12
    $region11: #{conv_block_forward.2} parent=5 // pred_region
      %s122 = ssub.s32 %s8, 1
      // Predicated region
      $region13: #{conv_block_forward.2} parent=11 // pred_check
        %p123 = pneg %p48
      $region14: #{conv_block_forward.2} parent=11 // pred_check_branch
        %125 = sbr.rel (%p123) target = $region16
      $region15: #{conv_block_forward.2} parent=11 // pred_region
        _
      $region16: #{conv_block_forward.2} parent=11 // pred_fallthru
        _
    $region12: #{conv_block_forward.2} parent=5 // pred_fallthru
      _
    %p126 = scmp.lt.s32.totalorder %s8, 16
    // Predicated region
    $region17: #{conv_block_forward.2} parent=5 // pred_check
      %p127 = pneg %p126
    $region18: #{conv_block_forward.2} parent=5 // pred_check_branch
      %129 = sbr.rel (%p127) target = $region20
    $region19: #{conv_block_forward.2} parent=5 // pred_region
      // Predicated region
      $region21: #{conv_block_forward.2} parent=19 // pred_check
        %p130 = pneg %p72
      $region22: #{conv_block_forward.2} parent=19 // pred_check_branch
        %132 = sbr.rel (%p130) target = $region24
      $region23: #{conv_block_forward.2} parent=19 // pred_region
        %p133 = scmp.lt.s32.totalorder %s15, 1
        %s134 = scalar_select %p133, %s15, 1
        %p135 = scmp.lt.s32.totalorder %s16, 7
        %s136 = scalar_select %p135, %s16, 7
        %p137 = scmp.lt.s32.totalorder %s17, 0
        %s138 = scalar_select %p137, %s17, 0
        %s139 = smul.addr %s136, 16
        %s140 = sadd.s32 %s138, %s139
        %s141 = smul.addr %s134, 128
        %s142 = sadd.s32 %s140, %s141
        %s143 = smul.addr %s142, 8
        %s144 = scalar_lea.vmem %s1, %s143
      $region24: #{conv_block_forward.2} parent=19 // pred_fallthru
        _
    $region20: #{conv_block_forward.2} parent=5 // pred_fallthru
      _
    %p145 = scmp.le.s32.totalorder 1, %s8
    %p146 = scmp.lt.s32.totalorder %s8, 17
    %p147 = pnand %p145, %p146
    %p148 = pneg %p147
    // Predicated region
    $region25: #{conv_block_forward.2} parent=5 // pred_check
      _
    $region26: #{conv_block_forward.2} parent=5 // pred_check_branch
      %150 = sbr.rel (%p147) target = $region28
    $region27: #{conv_block_forward.2} parent=5 // pred_region
      %s151 = ssub.s32 %s8, 1
      %p152 = pneg %p48
      %p153 = pneg %p45
      %p154 = scmp.lt.s32.totalorder %s18, 1
      %s155 = scalar_select %p154, %s18, 1
      %p156 = scmp.lt.s32.totalorder %s19, 7
      %s157 = scalar_select %p156, %s19, 7
      %p158 = scmp.lt.s32.totalorder %s20, 0
      %s159 = scalar_select %p158, %s20, 0
      %s160 = smul.addr %s157, 16
      %s161 = sadd.s32 %s159, %s160
      %s162 = smul.addr %s155, 128
      %s163 = sadd.s32 %s161, %s162
      %s164 = smul.addr %s163, 8
      %s165 = scalar_lea.vmem %s1, %s164
      %p166 = pneg %p78
      %p167 = pneg %p75
      %p168 = pneg %p108
      %p169 = pneg %p105
      %p170 = scmp.lt.s32.totalorder %s18, 1
      %s171 = scalar_select %p170, %s18, 1
      %p172 = scmp.lt.s32.totalorder %s19, 7
      %s173 = scalar_select %p172, %s19, 7
      %p174 = scmp.lt.s32.totalorder %s20, 0
      %s175 = scalar_select %p174, %s20, 0
      %s176 = sadd.s32 %s175, %s173
      %s177 = smul.addr %s171, 8
      %s178 = sadd.s32 %s176, %s177
      %s179 = smul.addr %s178, 8
      %s180 = scalar_lea.vmem %s2, %s179
      %p181 = scmp.lt.s32.totalorder %s18, 1
      %s182 = scalar_select %p181, %s18, 1
      %p183 = scmp.lt.s32.totalorder %s19, 7
      %s184 = scalar_select %p183, %s19, 7
      %p185 = scmp.lt.s32.totalorder %s20, 0
      %s186 = scalar_select %p185, %s20, 0
      %s187 = smul.addr %s184, 16
      %s188 = sadd.s32 %s186, %s187
      %s189 = smul.addr %s182, 128
      %s190 = sadd.s32 %s188, %s189
      %s191 = smul.addr %s190, 8
      %s192 = scalar_lea.vmem %s1, %s191
      %p193 = scmp.lt.s32.totalorder %s18, 1
      %s194 = scalar_select %p193, %s18, 1
      %p195 = scmp.lt.s32.totalorder %s19, 7
      %s196 = scalar_select %p195, %s19, 7
      %p197 = scmp.lt.s32.totalorder %s20, 0
      %s198 = scalar_select %p197, %s20, 0
      %s199 = sadd.s32 %s198, %s196
      %s200 = smul.addr %s194, 8
      %s201 = sadd.s32 %s199, %s200
      %s202 = smul.addr %s201, 8
      %s203 = scalar_lea.vmem %s2, %s202
      %v204 = vld [vmem:[%s0] sm:$0xff]
      %v205 = vld [vmem:[%s192] sm:$0xff]
      %v206 = vld [vmem:[%s192 + $0x8] sm:$0xff]
      %v207 = vld [vmem:[%s192 + $0x10] sm:$0xff]
      %v208 = vld [vmem:[%s192 + $0x18] sm:$0xff]
      %v209 = vld [vmem:[%s192 + $0x20] sm:$0xff]
      %v210 = vld [vmem:[%s192 + $0x28] sm:$0xff]
      %v211 = vld [vmem:[%s192 + $0x30] sm:$0xff]
      %v212 = vld [vmem:[%s192 + $0x38] sm:$0xff]
      %v213 = vld [vmem:[%s192 + $0x40] sm:$0xff]
      %v214 = vld [vmem:[%s192 + $0x48] sm:$0xff]
      %v215 = vld [vmem:[%s192 + $0x50] sm:$0xff]
      %v216 = vld [vmem:[%s192 + $0x58] sm:$0xff]
      %v217 = vld [vmem:[%s192 + $0x60] sm:$0xff]
      %v218 = vld [vmem:[%s192 + $0x68] sm:$0xff]
      %v219 = vld [vmem:[%s192 + $0x70] sm:$0xff]
      %v220 = vld [vmem:[%s192 + $0x78] sm:$0xff]
      %221 = vmatprep.subr.mxu0 0.0
      %222 = vmatpush1.msra.mxu0 %v205
      %223 = vmatprep.subr.mxu0 0.0
      %224 = vmatpush1.msra.mxu0 %v206
      %225 = vmatprep.subr.mxu0 0.0
      %226 = vmatpush1.msra.mxu0 %v207
      %227 = vmatprep.subr.mxu0 0.0
      %228 = vmatpush1.msra.mxu0 %v208
      %229 = vmatprep.subr.mxu0 0.0
      %230 = vmatpush1.msra.mxu0 %v209
      %231 = vmatprep.subr.mxu0 0.0
      %232 = vmatpush1.msra.mxu0 %v210
      %233 = vmatprep.subr.mxu0 0.0
      %234 = vmatpush1.msra.mxu0 %v211
      %235 = vmatprep.subr.mxu0 0.0
      %236 = vmatpush1.msra.mxu0 %v212
      %237 = vmatprep.subr.mxu0 0.0
      %238 = vmatpush1.msra.mxu0 %v213
      %239 = vmatprep.subr.mxu0 0.0
      %240 = vmatpush1.msra.mxu0 %v214
      %241 = vmatprep.subr.mxu0 0.0
      %242 = vmatpush1.msra.mxu0 %v215
      %243 = vmatprep.subr.mxu0 0.0
      %244 = vmatpush1.msra.mxu0 %v216
      %245 = vmatprep.subr.mxu0 0.0
      %246 = vmatpush1.msra.mxu0 %v217
      %247 = vmatprep.subr.mxu0 0.0
      %248 = vmatpush1.msra.mxu0 %v218
      %249 = vmatprep.subr.mxu0 0.0
      %250 = vmatpush1.msra.mxu0 %v219
      %251 = vmatprep.subr.mxu0 0.0
      %252 = vmatpush1.msra.mxu0 %v220
      %253 = vmatprep.subr.mxu0 0.0
      %254 = vmatpush1.msra.mxu0 0.0
      %255 = vmatprep.subr.mxu0 0.0
      %256 = vmatpush1.msra.mxu0 0.0
      %257 = vmatprep.subr.mxu0 0.0
      %258 = vmatpush1.msra.mxu0 0.0
      %259 = vmatprep.subr.mxu0 0.0
      %260 = vmatpush1.msra.mxu0 0.0
      %261 = vmatprep.subr.mxu0 0.0
      %262 = vmatpush1.msra.mxu0 0.0
      %263 = vmatprep.subr.mxu0 0.0
      %264 = vmatpush1.msra.mxu0 0.0
      %265 = vmatprep.subr.mxu0 0.0
      %266 = vmatpush1.msra.mxu0 0.0
      %267 = vmatprep.subr.mxu0 0.0
      %268 = vmatpush1.msra.mxu0 0.0
      %269 = vmatprep.subr.mxu0 0.0
      %270 = vmatpush1.msra.mxu0 0.0
      %271 = vmatprep.subr.mxu0 0.0
      %272 = vmatpush1.msra.mxu0 0.0
      %273 = vmatprep.subr.mxu0 0.0
      %274 = vmatpush1.msra.mxu0 0.0
      %275 = vmatprep.subr.mxu0 0.0
      %276 = vmatpush1.msra.mxu0 0.0
      %277 = vmatprep.subr.mxu0 0.0
      %278 = vmatpush1.msra.mxu0 0.0
      %279 = vmatprep.subr.mxu0 0.0
      %280 = vmatpush1.msra.mxu0 0.0
      %281 = vmatprep.subr.mxu0 0.0
      %282 = vmatpush1.msra.mxu0 0.0
      %283 = vmatprep.subr.mxu0 0.0
      %284 = vmatpush1.msra.mxu0 0.0
      %285 = vmatprep.mubr.f32.mxu0 0.0
      %286 = vmatmul.mubr.f32.gmra.mrb[0].mxu0 %v204
      %v287 = vpop.f32.mrb[0].mxu0
      %v288 = vadd.f32 0.0, %v287
      %v289 = vpop.f32.mrb[0].mxu0
      %290 = vdwg.mxu0
      %v291 = vmul.f32 %v288, 0.1
      %v292 = vmax.f32 %v288, %v291
      %vm293 = vcmask 523264
      %294 = vst.msk [vmem:[%s203] sm:$0xff] %vm293, %v292
      %p295 = scmp.lt.s32.totalorder %s18, 1
      %s296 = scalar_select %p295, %s18, 1
      %p297 = scmp.lt.s32.totalorder %s19, 7
      %s298 = scalar_select %p297, %s19, 7
      %p299 = scmp.lt.s32.totalorder %s20, 0
      %s300 = scalar_select %p299, %s20, 0
      %s301 = sadd.s32 %s300, %s298
      %s302 = smul.addr %s296, 8
      %s303 = sadd.s32 %s301, %s302
      %s304 = smul.addr %s303, 8
      %s305 = scalar_lea.vmem %s2, %s304
      // Predicated region
      $region29: #{conv_block_forward.2} parent=27 // pred_check
        %p306 = pneg %p105
      $region30: #{conv_block_forward.2} parent=27 // pred_check_branch
        %308 = sbr.rel (%p306) target = $region32
      $region31: #{conv_block_forward.2} parent=27 // pred_region
        _
      $region32: #{conv_block_forward.2} parent=27 // pred_fallthru
        _
    $region28: #{conv_block_forward.2} parent=5 // pred_fallthru
      _
    %p309 = scmp.le.s32.totalorder 2, %s8
    // Predicated region
    $region33: #{conv_block_forward.2} parent=5 // pred_check
      %p310 = pneg %p309
    $region34: #{conv_block_forward.2} parent=5 // pred_check_branch
      %312 = sbr.rel (%p310) target = $region36
    $region35: #{conv_block_forward.2} parent=5 // pred_region
      %s313 = ssub.s32 %s8, 2
      // Predicated region
      $region37: #{conv_block_forward.2} parent=35 // pred_check
        %p314 = pneg %p111
      $region38: #{conv_block_forward.2} parent=35 // pred_check_branch
        %316 = sbr.rel (%p314) target = $region40
      $region39: #{conv_block_forward.2} parent=35 // pred_region
        %p317 = scmp.lt.s32.totalorder %s21, 1
        %s318 = scalar_select %p317, %s21, 1
        %p319 = scmp.lt.s32.totalorder %s22, 7
        %s320 = scalar_select %p319, %s22, 7
        %p321 = scmp.lt.s32.totalorder %s23, 0
        %s322 = scalar_select %p321, %s23, 0
        %s323 = sadd.s32 %s322, %s320
        %s324 = smul.addr %s318, 8
        %s325 = sadd.s32 %s323, %s324
        %s326 = smul.addr %s325, 8
        %s327 = scalar_lea.vmem %s2, %s326
      $region40: #{conv_block_forward.2} parent=35 // pred_fallthru
        _
    $region36: #{conv_block_forward.2} parent=5 // pred_fallthru
      _
  $region6: #{conv_block_forward.2} parent=0 // loop_footer
    %s12 = sadd.s32 1, %s8
  $region7: #{conv_block_forward.2} parent=0 // loop_footer_branch
    %7 = sbr.rel target = $region3
  $region8: #{conv_block_forward.2} parent=0 // loop_exit
    _

// kernel: conv_block_forward.3
$region0: #{conv_block_forward.3}
  #allocation0 [shape = 'u32[]', space=smem, size = 0x4, offset = 0x4, fixed_abs, tag = 'smem constant byte address 0x4 - core index']
  #allocation1 [shape = 'u32[144,128]{1,0:T(1,128)}', space=vmem, size = 0x12000, scoped, tag = 'internal scratch']
  %s0 = inlined_call_operand.vmem [shape: f32[8,256], index: 0, kind: input, shape index: {}]
  %s1 = inlined_call_operand.vmem [shape: f32[2,8,256,64], index: 1, kind: input, shape index: {}]
  %s2 = inlined_call_operand.vmem [shape: f32[2,8,8,64], index: 2, kind: output, shape index: {}]
  %s3 = sld [smem:[#allocation0]]
  $region41: #{conv_block_forward.3} parent=0
    _
  %s5 = ssub.s32 1, %s3
  %s6 = scalar_select 0, %s5, %s3
  loop: start=0, step=1, limit=18
  $region2: #{conv_block_forward.3} parent=0 // loop_pre_header
    _
  $region3: #{conv_block_forward.3} parent=0 // loop_header
    %s8 = sphi 0, %s12
    %p9 = scmp.ge.s32.totalorder %s8, 18
    %s15 = sphi 0, %s34
    %s16 = sphi 0, %s30
    %s17 = sphi 0, %s26
    %s18 = sphi 0, %s15
    %s19 = sphi 0, %s16
    %s20 = sphi 0, %s17
    %s21 = sphi 0, %s18
    %s22 = sphi 0, %s19
    %s23 = sphi 0, %s20
    %s35 = sphi 0, %s35
    %s37 = sphi 0, %s35
    %s38 = sphi 0, %s37
    %s52 = sphi 0, %s38
    %s62 = sphi 0, %s64
    %s65 = sphi 0, %s62
    %s66 = sphi 0, %s65
    %s82 = sphi 0, %s66
    %s92 = sphi 0, %s94
    %s95 = sphi 0, %s92
    %s96 = sphi 0, %s95
    %s112 = sphi 0, %s96
  $region4: #{conv_block_forward.3} parent=0 // loop_header_branch
    %11 = sbr.rel (%p9) target = $region8
  $region5: #{conv_block_forward.3} parent=0 // loop_body
    %s13 = ssub.s32 %s8, 1
    %s14 = ssub.s32 %s8, 2
    %s24 = sadd.s32 1, %s17
    %p25 = scmp.ge.s32.totalorder %s24, 1
    %s26 = scalar_select %p25, 0, %s24
    %s27 = sadd.s32 1, %s16
    %s28 = scalar_select %p25, %s27, %s16
    %p29 = scmp.ge.s32.totalorder %s28, 8
    %s30 = scalar_select %p29, 0, %s28
    %s31 = sadd.s32 1, %s15
    %s32 = scalar_select %p29, %s31, %s15
    %p33 = scmp.ge.s32.totalorder %s32, 2
    %s34 = scalar_select %p33, 0, %s32
    %s36 = sadd.s32 %s35, 1
    %p39 = scmp.eq.s32.totalorder %s8, 15
    %p40 = scmp.ne.s32.totalorder %s35, %s37
    %p41 = scmp.eq.s32.totalorder %s8, 0
    %p42 = por %p40, %p41
    %p43 = scmp.ne.s32.totalorder %s35, %s37
    %p44 = scmp.eq.s32.totalorder %s13, 15
    %p45 = por %p43, %p44
    %p46 = scmp.ne.s32.totalorder %s37, %s38
    %p47 = scmp.eq.s32.totalorder %s13, 0
    %p48 = por %p46, %p47
    %p49 = scmp.ne.s32.totalorder %s37, %s38
    %p50 = scmp.eq.s32.totalorder %s14, 15
    %p51 = por %p49, %p50
    %p53 = scmp.ne.s32.totalorder %s38, %s52
    %p54 = scmp.eq.s32.totalorder %s14, 0
    %p55 = por %p53, %p54
    %s56 = ssub.s32 %s15, %s34
    %s57 = ssub.s32 %s16, %s30
    %s58 = sor.u32 %s56, %s57
    %s59 = ssub.s32 %s17, %s26
    %s60 = sor.u32 %s58, %s59
    %p61 = scmp.eq.s32.totalorder %s60, 0
    %s63 = sadd.s32 %s62, 1
    %s64 = scalar_select %p61, %s62, %s63
    %p67 = pneg %p61
    %p68 = scmp.eq.s32.totalorder %s8, 15
    %p69 = por %p67, %p68
    %p70 = scmp.ne.s32.totalorder %s62, %s65
    %p71 = scmp.eq.s32.totalorder %s8, 0
    %p72 = por %p70, %p71
    %p73 = scmp.ne.s32.totalorder %s62, %s65
    %p74 = scmp.eq.s32.totalorder %s13, 15
    %p75 = por %p73, %p74
    %p76 = scmp.ne.s32.totalorder %s65, %s66
    %p77 = scmp.eq.s32.totalorder %s13, 0
    %p78 = por %p76, %p77
    %p79 = scmp.ne.s32.totalorder %s65, %s66
    %p80 = scmp.eq.s32.totalorder %s14, 15
    %p81 = por %p79, %p80
    %p83 = scmp.ne.s32.totalorder %s66, %s82
    %p84 = scmp.eq.s32.totalorder %s14, 0
    %p85 = por %p83, %p84
    %s86 = ssub.s32 %s15, %s34
    %s87 = ssub.s32 %s16, %s30
    %s88 = sor.u32 %s86, %s87
    %s89 = ssub.s32 %s17, %s26
    %s90 = sor.u32 %s88, %s89
    %p91 = scmp.eq.s32.totalorder %s90, 0
    %s93 = sadd.s32 %s92, 1
    %s94 = scalar_select %p91, %s92, %s93
    %p97 = pneg %p91
    %p98 = scmp.eq.s32.totalorder %s8, 15
    %p99 = por %p97, %p98
    %p100 = scmp.ne.s32.totalorder %s92, %s95
    %p101 = scmp.eq.s32.totalorder %s8, 0
    %p102 = por %p100, %p101
    %p103 = scmp.ne.s32.totalorder %s92, %s95
    %p104 = scmp.eq.s32.totalorder %s13, 15
    %p105 = por %p103, %p104
    %p106 = scmp.ne.s32.totalorder %s95, %s96
    %p107 = scmp.eq.s32.totalorder %s13, 0
    %p108 = por %p106, %p107
    %p109 = scmp.ne.s32.totalorder %s95, %s96
    %p110 = scmp.eq.s32.totalorder %s14, 15
    %p111 = por %p109, %p110
    %p113 = scmp.ne.s32.totalorder %s96, %s112
    %p114 = scmp.eq.s32.totalorder %s14, 0
    %p115 = por %p113, %p114
    %p116 = scmp.le.s32.totalorder 1, %s8
    %p117 = scmp.lt.s32.totalorder %s8, 17
    %p118 = pnand %p116, %p117
    %p119 = pneg %p118
    // Predicated region
    $region9: #{conv_block_forward.3} parent=5 // pred_check
      _
    $region10: #{conv_block_forward.3} parent=5 // pred_check_branch
      %121 = sbr.rel (%p118) target = $region12
    $region11: #{conv_block_forward.3} parent=5 // pred_region
      %s122 = ssub.s32 %s8, 1
      // Predicated region
      $region13: #{conv_block_forward.3} parent=11 // pred_check
        %p123 = pneg %p48
      $region14: #{conv_block_forward.3} parent=11 // pred_check_branch
        %125 = sbr.rel (%p123) target = $region16
      $region15: #{conv_block_forward.3} parent=11 // pred_region
        _
      $region16: #{conv_block_forward.3} parent=11 // pred_fallthru
        _
    $region12: #{conv_block_forward.3} parent=5 // pred_fallthru
      _
    %p126 = scmp.lt.s32.totalorder %s8, 16
    // Predicated region
    $region17: #{conv_block_forward.3} parent=5 // pred_check
      %p127 = pneg %p126
    $region18: #{conv_block_forward.3} parent=5 // pred_check_branch
      %129 = sbr.rel (%p127) target = $region20
    $region19: #{conv_block_forward.3} parent=5 // pred_region
      // Predicated region
      $region21: #{conv_block_forward.3} parent=19 // pred_check
        %p130 = pneg %p72
      $region22: #{conv_block_forward.3} parent=19 // pred_check_branch
        %132 = sbr.rel (%p130) target = $region24
      $region23: #{conv_block_forward.3} parent=19 // pred_region
        %p133 = scmp.lt.s32.totalorder %s15, 1
        %s134 = scalar_select %p133, %s15, 1
        %p135 = scmp.lt.s32.totalorder %s16, 7
        %s136 = scalar_select %p135, %s16, 7
        %p137 = scmp.lt.s32.totalorder %s17, 0
        %s138 = scalar_select %p137, %s17, 0
        %s139 = smul.addr %s136, 32
        %s140 = sadd.s32 %s138, %s139
        %s141 = smul.addr %s134, 256
        %s142 = sadd.s32 %s140, %s141
        %s143 = smul.addr %s142, 8
        %s144 = scalar_lea.vmem %s1, %s143
      $region24: #{conv_block_forward.3} parent=19 // pred_fallthru
        _
    $region20: #{conv_block_forward.3} parent=5 // pred_fallthru
      _
    %p145 = scmp.le.s32.totalorder 1, %s8
    %p146 = scmp.lt.s32.totalorder %s8, 17
    %p147 = pnand %p145, %p146
    %p148 = pneg %p147
    // Predicated region
    $region25: #{conv_block_forward.3} parent=5 // pred_check
      _
    $region26: #{conv_block_forward.3} parent=5 // pred_check_branch
      %150 = sbr.rel (%p147) target = $region28
    $region27: #{conv_block_forward.3} parent=5 // pred_region
      %s151 = ssub.s32 %s8, 1
      %p152 = pneg %p48
      %p153 = pneg %p45
      %p154 = scmp.lt.s32.totalorder %s18, 1
      %s155 = scalar_select %p154, %s18, 1
      %p156 = scmp.lt.s32.totalorder %s19, 7
      %s157 = scalar_select %p156, %s19, 7
      %p158 = scmp.lt.s32.totalorder %s20, 0
      %s159 = scalar_select %p158, %s20, 0
      %s160 = smul.addr %s157, 32
      %s161 = sadd.s32 %s159, %s160
      %s162 = smul.addr %s155, 256
      %s163 = sadd.s32 %s161, %s162
      %s164 = smul.addr %s163, 8
      %s165 = scalar_lea.vmem %s1, %s164
      %p166 = pneg %p78
      %p167 = pneg %p75
      %p168 = pneg %p108
      %p169 = pneg %p105
      %p170 = scmp.lt.s32.totalorder %s18, 1
      %s171 = scalar_select %p170, %s18, 1
      %p172 = scmp.lt.s32.totalorder %s19, 7
      %s173 = scalar_select %p172, %s19, 7
      %p174 = scmp.lt.s32.totalorder %s20, 0
      %s175 = scalar_select %p174, %s20, 0
      %s176 = sadd.s32 %s175, %s173
      %s177 = smul.addr %s171, 8
      %s178 = sadd.s32 %s176, %s177
      %s179 = smul.addr %s178, 8
      %s180 = scalar_lea.vmem %s2, %s179
      %p181 = scmp.lt.s32.totalorder %s18, 1
      %s182 = scalar_select %p181, %s18, 1
      %p183 = scmp.lt.s32.totalorder %s19, 7
      %s184 = scalar_select %p183, %s19, 7
      %p185 = scmp.lt.s32.totalorder %s20, 0
      %s186 = scalar_select %p185, %s20, 0
      %s187 = smul.addr %s184, 32
      %s188 = sadd.s32 %s186, %s187
      %s189 = smul.addr %s182, 256
      %s190 = sadd.s32 %s188, %s189
      %s191 = smul.addr %s190, 8
      %s192 = scalar_lea.vmem %s1, %s191
      %p193 = scmp.lt.s32.totalorder %s18, 1
      %s194 = scalar_select %p193, %s18, 1
      %p195 = scmp.lt.s32.totalorder %s19, 7
      %s196 = scalar_select %p195, %s19, 7
      %p197 = scmp.lt.s32.totalorder %s20, 0
      %s198 = scalar_select %p197, %s20, 0
      %s199 = sadd.s32 %s198, %s196
      %s200 = smul.addr %s194, 8
      %s201 = sadd.s32 %s199, %s200
      %s202 = smul.addr %s201, 8
      %s203 = scalar_lea.vmem %s2, %s202
      %v204 = vld [vmem:[%s0] sm:$0xff]
      %v205 = vld [vmem:[%s0 + $0x8] sm:$0xff]
      %v206 = vld [vmem:[%s192] sm:$0xff]
      %v207 = vld [vmem:[%s192 + $0x8] sm:$0xff]
      %v208 = vld [vmem:[%s192 + $0x10] sm:$0xff]
      %v209 = vld [vmem:[%s192 + $0x18] sm:$0xff]
      %v210 = vld [vmem:[%s192 + $0x20] sm:$0xff]
      %v211 = vld [vmem:[%s192 + $0x28] sm:$0xff]
      %v212 = vld [vmem:[%s192 + $0x30] sm:$0xff]
      %v213 = vld [vmem:[%s192 + $0x38] sm:$0xff]
      %v214 = vld [vmem:[%s192 + $0x40] sm:$0xff]
      %v215 = vld [vmem:[%s192 + $0x48] sm:$0xff]
      %v216 = vld [vmem:[%s192 + $0x50] sm:$0xff]
      %v217 = vld [vmem:[%s192 + $0x58] sm:$0xff]
      %v218 = vld [vmem:[%s192 + $0x60] sm:$0xff]
      %v219 = vld [vmem:[%s192 + $0x68] sm:$0xff]
      %v220 = vld [vmem:[%s192 + $0x70] sm:$0xff]
      %v221 = vld [vmem:[%s192 + $0x78] sm:$0xff]
      %v222 = vld [vmem:[%s192 + $0x80] sm:$0xff]
      %v223 = vld [vmem:[%s192 + $0x88] sm:$0xff]
      %v224 = vld [vmem:[%s192 + $0x90] sm:$0xff]
      %v225 = vld [vmem:[%s192 + $0x98] sm:$0xff]
      %v226 = vld [vmem:[%s192 + $0xa0] sm:$0xff]
      %v227 = vld [vmem:[%s192 + $0xa8] sm:$0xff]
      %v228 = vld [vmem:[%s192 + $0xb0] sm:$0xff]
      %v229 = vld [vmem:[%s192 + $0xb8] sm:$0xff]
      %v230 = vld [vmem:[%s192 + $0xc0] sm:$0xff]
      %v231 = vld [vmem:[%s192 + $0xc8] sm:$0xff]
      %v232 = vld [vmem:[%s192 + $0xd0] sm:$0xff]
      %v233 = vld [vmem:[%s192 + $0xd8] sm:$0xff]
      %v234 = vld [vmem:[%s192 + $0xe0] sm:$0xff]
      %v235 = vld [vmem:[%s192 + $0xe8] sm:$0xff]
      %v236 = vld [vmem:[%s192 + $0xf0] sm:$0xff]
      %v237 = vld [vmem:[%s192 + $0xf8] sm:$0xff]
      %238 = vmatprep.subr.mxu0 0.0
      %239 = vmatpush1.msra.mxu0 %v206
      %240 = vmatprep.subr.mxu0 0.0
      %241 = vmatpush1.msra.mxu0 %v207
      %242 = vmatprep.subr.mxu0 0.0
      %243 = vmatpush1.msra.mxu0 %v208
      %244 = vmatprep.subr.mxu0 0.0
      %245 = vmatpush1.msra.mxu0 %v209
      %246 = vmatprep.subr.mxu0 0.0
      %247 = vmatpush1.msra.mxu0 %v210
      %248 = vmatprep.subr.mxu0 0.0
      %249 = vmatpush1.msra.mxu0 %v211
      %250 = vmatprep.subr.mxu0 0.0
      %251 = vmatpush1.msra.mxu0 %v212
      %252 = vmatprep.subr.mxu0 0.0
      %253 = vmatpush1.msra.mxu0 %v213
      %254 = vmatprep.subr.mxu0 0.0
      %255 = vmatpush1.msra.mxu0 %v214
      %256 = vmatprep.subr.mxu0 0.0
      %257 = vmatpush1.msra.mxu0 %v215
      %258 = vmatprep.subr.mxu0 0.0
      %259 = vmatpush1.msra.mxu0 %v216
      %260 = vmatprep.subr.mxu0 0.0
      %261 = vmatpush1.msra.mxu0 %v217
      %262 = vmatprep.subr.mxu0 0.0
      %263 = vmatpush1.msra.mxu0 %v218
      %264 = vmatprep.subr.mxu0 0.0
      %265 = vmatpush1.msra.mxu0 %v219
      %266 = vmatprep.subr.mxu0 0.0
      %267 = vmatpush1.msra.mxu0 %v220
      %268 = vmatprep.subr.mxu0 0.0
      %269 = vmatpush1.msra.mxu0 %v221
      %270 = vmatprep.subr.mxu0 0.0
      %271 = vmatpush1.msra.mxu0 %v222
      %272 = vmatprep.subr.mxu0 0.0
      %273 = vmatpush1.msra.mxu0 %v223
      %274 = vmatprep.subr.mxu0 0.0
      %275 = vmatpush1.msra.mxu0 %v224
      %276 = vmatprep.subr.mxu0 0.0
      %277 = vmatpush1.msra.mxu0 %v225
      %278 = vmatprep.subr.mxu0 0.0
      %279 = vmatpush1.msra.mxu0 %v226
      %280 = vmatprep.subr.mxu0 0.0
      %281 = vmatpush1.msra.mxu0 %v227
      %282 = vmatprep.subr.mxu0 0.0
      %283 = vmatpush1.msra.mxu0 %v228
      %284 = vmatprep.subr.mxu0 0.0
      %285 = vmatpush1.msra.mxu0 %v229
      %286 = vmatprep.subr.mxu0 0.0
      %287 = vmatpush1.msra.mxu0 %v230
      %288 = vmatprep.subr.mxu0 0.0
      %289 = vmatpush1.msra.mxu0 %v231
      %290 = vmatprep.subr.mxu0 0.0
      %291 = vmatpush1.msra.mxu0 %v232
      %292 = vmatprep.subr.mxu0 0.0
      %293 = vmatpush1.msra.mxu0 %v233
      %294 = vmatprep.subr.mxu0 0.0
      %295 = vmatpush1.msra.mxu0 %v234
      %296 = vmatprep.subr.mxu0 0.0
      %297 = vmatpush1.msra.mxu0 %v235
      %298 = vmatprep.subr.mxu0 0.0
      %299 = vmatpush1.msra.mxu0 %v236
      %300 = vmatprep.subr.mxu0 0.0
      %301 = vmatpush1.msra.mxu0 %v237
      %302 = vmatprep.mubr.f32.mxu0 %v205
      %303 = vmatmul.mubr.f32.gmra.mrb[0].mxu0 %v204
      %v304 = vpop.f32.mrb[0].mxu0
      %v305 = vadd.f32 0.0, %v304
      %v306 = vpop.f32.mrb[0].mxu0
      %307 = vdwg.mxu0
      %v308 = vmul.f32 %v305, 0.1
      %v309 = vmax.f32 %v305, %v308
      %vm310 = vcmask 523264
      %311 = vst.msk [vmem:[%s203] sm:$0xff] %vm310, %v309
      %p312 = scmp.lt.s32.totalorder %s18, 1
      %s313 = scalar_select %p312, %s18, 1
      %p314 = scmp.lt.s32.totalorder %s19, 7
      %s315 = scalar_select %p314, %s19, 7
      %p316 = scmp.lt.s32.totalorder %s20, 0
      %s317 = scalar_select %p316, %s20, 0
      %s318 = sadd.s32 %s317, %s315
      %s319 = smul.addr %s313, 8
      %s320 = sadd.s32 %s318, %s319
      %s321 = smul.addr %s320, 8
      %s322 = scalar_lea.vmem %s2, %s321
      // Predicated region
      $region29: #{conv_block_forward.3} parent=27 // pred_check
        %p323 = pneg %p105
      $region30: #{conv_block_forward.3} parent=27 // pred_check_branch
        %325 = sbr.rel (%p323) target = $region32
      $region31: #{conv_block_forward.3} parent=27 // pred_region
        _
      $region32: #{conv_block_forward.3} parent=27 // pred_fallthru
        _
    $region28: #{conv_block_forward.3} parent=5 // pred_fallthru
      _
    %p326 = scmp.le.s32.totalorder 2, %s8
    // Predicated region
    $region33: #{conv_block_forward.3} parent=5 // pred_check
      %p327 = pneg %p326
    $region34: #{conv_block_forward.3} parent=5 // pred_check_branch
      %329 = sbr.rel (%p327) target = $region36
    $region35: #{conv_block_forward.3} parent=5 // pred_region
      %s330 = ssub.s32 %s8, 2
      // Predicated region
      $region37: #{conv_block_forward.3} parent=35 // pred_check
        %p331 = pneg %p111
      $region38: #{conv_block_forward.3} parent=35 // pred_check_branch
        %333 = sbr.rel (%p331) target = $region40
      $region39: #{conv_block_forward.3} parent=35 // pred_region
        %p334 = scmp.lt.s32.totalorder %s21, 1
        %s335 = scalar_select %p334, %s21, 1
        %p336 = scmp.lt.s32.totalorder %s22, 7
        %s337 = scalar_select %p336, %s22, 7
        %p338 = scmp.lt.s32.totalorder %s23, 0
        %s339 = scalar_select %p338, %s23, 0
        %s340 = sadd.s32 %s339, %s337
        %s341 = smul.addr %s335, 8
        %s342 = sadd.s32 %s340, %s341
        %s343 = smul.addr %s342, 8
        %s344 = scalar_lea.vmem %s2, %s343
      $region40: #{conv_block_forward.3} parent=35 // pred_fallthru
        _
    $region36: #{conv_block_forward.3} parent=5 // pred_fallthru
      _
  $region6: #{conv_block_forward.3} parent=0 // loop_footer
    %s12 = sadd.s32 1, %s8
  $region7: #{conv_block_forward.3} parent=0 // loop_footer_branch
    %7 = sbr.rel target = $region3
  $region8: #{conv_block_forward.3} parent=0 // loop_exit
    _

</llo_original>
